<compile_context>
chip_gen: v6e
topology: v6e:2x2x1
jax: 0.10.0
libtpu: 0.0.40
codegen_flags: <defaults>
</compile_context>

<pallas_src>
import jax
import jax.numpy as jnp
from jax.experimental import pallas as pl
from jax.experimental.pallas import tpu as pltpu

HIDDEN = 1024     # hubert-large-ls960-ft hidden_size
MID = 256         # classifier intermediate width
NUM_LABELS = 8    # number of language labels (example)
LANE = 128        # TPU lane width


def _make_kernel(inv_s):
    """Builds the fused (mean-pool + 2-layer MLP head) kernel.

    Refs (per grid step):
      h_ref  : [B_t, S_t, H]   streamed hidden-state tile (any float dtype)
      w1_ref : [H, MID]        first linear weight (VMEM-resident)
      b1_ref : [1, MID]
      w2_ref : [MID, L_PAD]    second linear weight, zero-padded to lane width
      b2_ref : [1, L_PAD]
      out_ref: [B_t, L_PAD]    padded logits (resident across the S axis)
      acc_ref: [B_t, H] f32    running sequence-sum accumulator (scratch)
    """

    def kernel(h_ref, w1_ref, b1_ref, w2_ref, b2_ref, out_ref, acc_ref):
        s = pl.program_id(1)

        @pl.when(s == 0)
        def _init():
            acc_ref[...] = jnp.zeros_like(acc_ref)

        # Partial sum over this sequence tile, accumulated in f32.
        acc_ref[...] += jnp.sum(h_ref[...].astype(jnp.float32), axis=1)

        @pl.when(s == pl.num_programs(1) - 1)
        def _finalize():
            # mean = sum * (1/S)   (sum-then-scale; 1/S is a trace-time const)
            pooled = acc_ref[...] * inv_s                           # [B_t, H]

            # Linear(H, 256) + ReLU   (MXU, f32 accumulation)
            z1 = jnp.dot(pooled, w1_ref[...],
                         preferred_element_type=jnp.float32)
            z1 = jnp.maximum(z1 + b1_ref[...], 0.0)

            # Dropout(0.2): identity in eval mode.

            # Linear(256, num_labels) into a lane-dense padded block.
            z2 = jnp.dot(z1, w2_ref[...],
                         preferred_element_type=jnp.float32)
            out_ref[...] = (z2 + b2_ref[...]).astype(out_ref.dtype)

    return kernel


def hubert_classifier_head(hidden_states, w1, b1, w2, b2, *,
                           s_tile=None, b_tile=None):
    """hidden_states [B, S, H] -> logits [B, num_labels]."""
    B, S, H = hidden_states.shape
    mid = w1.shape[1]
    L = w2.shape[1]
    L_PAD = pl.cdiv(L, LANE) * LANE

    itemsize = hidden_states.dtype.itemsize

    # --- choose tile sizes ---------------------------------------------------
    if b_tile is None:
        b_tile = 8 if (B % 8 == 0 and B > 8) else B
    assert B % b_tile == 0, "b_tile must divide batch"

    if s_tile is None:
        # Keep each streamed input block <= ~4 MiB (fits 2-deep buffering on
        # every generation's scoped-VMEM budget while staying near the HBM
        # roofline).
        max_rows = max(8, (4 * 1024 * 1024) // (b_tile * H * itemsize))
        s_tile = min(512, (max_rows // 8) * 8)
    s_tile = max(8, (s_tile // 8) * 8)
    s_tile = min(s_tile, pl.cdiv(S, 8) * 8)   # don't over-pad tiny sequences

    # Pad S with zeros so it divides s_tile (zeros don't affect the sum; we
    # still scale by the true 1/S).
    s_pad = pl.cdiv(S, s_tile) * s_tile
    if s_pad != S:
        hidden_states = jnp.pad(hidden_states,
                                ((0, 0), (0, s_pad - S), (0, 0)))

    # --- parameter reshaping / padding --------------------------------------
    b1_2d = b1.reshape(1, mid).astype(jnp.float32)
    w1_f = w1.astype(jnp.float32)
    w2_pad = jnp.pad(w2.astype(jnp.float32), ((0, 0), (0, L_PAD - L)))
    b2_pad = jnp.pad(b2.reshape(1, L).astype(jnp.float32),
                     ((0, 0), (0, L_PAD - L)))

    grid = (B // b_tile, s_pad // s_tile)

    # --- VMEM budget + cost hint ---------------------------------------------
    in_block_bytes = b_tile * s_tile * H * itemsize
    weight_bytes = (H * mid + mid + mid * L_PAD + L_PAD) * 4
    out_block_bytes = b_tile * L_PAD * 4
    acc_bytes = b_tile * H * 4
    vmem_bytes = (2 * in_block_bytes + 2 * weight_bytes
                  + 2 * out_block_bytes + acc_bytes + (4 << 20))
    vmem_bytes = int(min(vmem_bytes, 48 << 20))

    cost = pl.CostEstimate(
        flops=int(B * s_pad * H            # sequence-sum adds
                  + 2 * B * H * mid        # first matmul
                  + 2 * B * mid * L_PAD),  # second matmul
        transcendentals=0,
        bytes_accessed=int(B * s_pad * H * itemsize
                           + weight_bytes + B * L_PAD * 4),
    )

    grid_spec = pltpu.PrefetchScalarGridSpec(
        num_scalar_prefetch=0,
        grid=grid,
        in_specs=[
            # streamed hidden-state tile
            pl.BlockSpec((b_tile, s_tile, H), lambda b, s: (b, s, 0)),
            # classifier params: constant index maps -> VMEM-resident
            pl.BlockSpec((H, mid), lambda b, s: (0, 0)),
            pl.BlockSpec((1, mid), lambda b, s: (0, 0)),
            pl.BlockSpec((mid, L_PAD), lambda b, s: (0, 0)),
            pl.BlockSpec((1, L_PAD), lambda b, s: (0, 0)),
        ],
        # output block is constant across the S (reduction) axis
        out_specs=pl.BlockSpec((b_tile, L_PAD), lambda b, s: (b, 0)),
        scratch_shapes=[pltpu.VMEM((b_tile, H), jnp.float32)],
    )

    logits_padded = pl.pallas_call(
        _make_kernel(1.0 / float(S)),
        out_shape=jax.ShapeDtypeStruct((B, L_PAD), jnp.float32),
        grid_spec=grid_spec,
        compiler_params=pltpu.CompilerParams(
            dimension_semantics=("parallel", "arbitrary"),
            vmem_limit_bytes=vmem_bytes,
        ),
        cost_estimate=cost,
    )(hidden_states, w1_f, b1_2d, w2_pad, b2_pad)

    return logits_padded[:, :L]


def _reference(hidden_states, w1, b1, w2, b2):
    pooled = jnp.mean(hidden_states.astype(jnp.float32), axis=1)
    z1 = jnp.maximum(pooled @ w1 + b1, 0.0)
    return z1 @ w2 + b2


if __name__ == "__main__":
    key = jax.random.PRNGKey(0)
    k_h, k_w1, k_b1, k_w2, k_b2 = jax.random.split(key, 5)

    # Small example shapes consistent with the module.
    B, S = 2, 16   # batch, sequence frames out of HuBERT
    # Stream hidden states in bf16 (perf: halves HBM bytes moved).
    hidden_states = jax.random.normal(
        k_h, (B, S, HIDDEN), dtype=jnp.float32).astype(jnp.bfloat16)

    # Deterministic synthetic classifier parameters (stored as [in, out]).
    w1 = jax.random.normal(k_w1, (HIDDEN, MID), dtype=jnp.float32) * 0.02
    b1 = jax.random.normal(k_b1, (MID,), dtype=jnp.float32) * 0.02
    w2 = jax.random.normal(k_w2, (MID, NUM_LABELS), dtype=jnp.float32) * 0.02
    b2 = jax.random.normal(k_b2, (NUM_LABELS,), dtype=jnp.float32) * 0.02

    # s_tile=8 -> two S grid steps: exercises init/accumulate/finalize path.
    logits = hubert_classifier_head(hidden_states, w1, b1, w2, b2, s_tile=8)
    logits = jax.block_until_ready(logits)

    ref = _reference(hidden_states, w1, b1, w2, b2)
    assert logits.shape == (B, NUM_LABELS)
    assert jnp.allclose(logits, ref, atol=1e-3, rtol=1e-3), "mismatch vs reference"

    print("KERNEL_OK")
</pallas_src>

<mosaic_0001>
module attributes {stable_mosaic.version = 11 : i64} {
  func.func @kernel(%arg0: i32, %arg1: i32, %arg2: memref<2x8x1024xbf16, #tpu.memory_space<vmem>>, %arg3: memref<1024x256xf32, #tpu.memory_space<vmem>>, %arg4: memref<1x256xf32, #tpu.memory_space<vmem>>, %arg5: memref<256x128xf32, #tpu.memory_space<vmem>>, %arg6: memref<1x128xf32, #tpu.memory_space<vmem>>, %arg7: memref<2x128xf32, #tpu.memory_space<vmem>>, %arg8: memref<2x1024xf32, #tpu.memory_space<vmem>>) attributes {dimension_semantics = [#tpu.dimension_semantics<parallel>, #tpu.dimension_semantics<arbitrary>], iteration_bounds = array<i64: 1, 2>, scalar_prefetch = 0 : i64, scratch_operands = 1 : i64, tpu.core_type = #tpu.core_type<tc>, window_params = [{transform_indices = @transform_0, window_bounds = array<i64: 2, 8, 1024>}, {pipeline_mode = #tpu.pipeline_mode<synchronous>, transform_indices = @transform_1, window_bounds = array<i64: 1024, 256>}, {pipeline_mode = #tpu.pipeline_mode<synchronous>, transform_indices = @transform_2, window_bounds = array<i64: 1, 256>}, {pipeline_mode = #tpu.pipeline_mode<synchronous>, transform_indices = @transform_3, window_bounds = array<i64: 256, 128>}, {pipeline_mode = #tpu.pipeline_mode<synchronous>, transform_indices = @transform_4, window_bounds = array<i64: 1, 128>}, {transform_indices = @transform_5, window_bounds = array<i64: 2, 128>}]} {
    %c0_i32 = arith.constant 0 : i32
    %0 = arith.cmpi eq, %arg1, %c0_i32 : i32
    %1 = arith.extui %0 : i1 to i32
    %c0_i32_0 = arith.constant 0 : i32
    %2 = arith.cmpi ne, %1, %c0_i32_0 : i32
    scf.if %2 {
      %cst_8 = arith.constant 0.000000e+00 : f32
      %12 = vector.broadcast %cst_8 : f32 to vector<2x1024xf32>
      %c0_9 = arith.constant 0 : index
      %c0_10 = arith.constant 0 : index
      %13 = vector.load %arg8[%c0_9, %c0_10] : memref<2x1024xf32, #tpu.memory_space<vmem>>, vector<2x1024xf32>
      tpu.vector_store %arg8[%c0_9, %c0_10], %12 {strides = array<i32>} : memref<2x1024xf32, #tpu.memory_space<vmem>>, vector<2x1024xf32>,
    } else {
    }
    %c0 = arith.constant 0 : index
    %c0_1 = arith.constant 0 : index
    %3 = vector.load %arg8[%c0, %c0_1] : memref<2x1024xf32, #tpu.memory_space<vmem>>, vector<2x1024xf32>
    %c0_2 = arith.constant 0 : index
    %c0_3 = arith.constant 0 : index
    %c0_4 = arith.constant 0 : index
    %4 = vector.load %arg2[%c0_2, %c0_3, %c0_4] : memref<2x8x1024xbf16, #tpu.memory_space<vmem>>, vector<2x8x1024xbf16>
    %5 = arith.extf %4 : vector<2x8x1024xbf16> to vector<2x8x1024xf32>
    %cst = arith.constant dense<0.000000e+00> : vector<2x1024xf32>
    %6 = vector.multi_reduction <add>, %5, %cst [1] : vector<2x8x1024xf32> to vector<2x1024xf32>
    %7 = arith.addf %3, %6 : vector<2x1024xf32>
    %c0_5 = arith.constant 0 : index
    %c0_6 = arith.constant 0 : index
    %8 = vector.load %arg8[%c0_5, %c0_6] : memref<2x1024xf32, #tpu.memory_space<vmem>>, vector<2x1024xf32>
    tpu.vector_store %arg8[%c0_5, %c0_6], %7 {strides = array<i32>} : memref<2x1024xf32, #tpu.memory_space<vmem>>, vector<2x1024xf32>,
    %c1_i32 = arith.constant 1 : i32
    %9 = arith.cmpi eq, %arg1, %c1_i32 : i32
    %10 = arith.extui %9 : i1 to i32
    %c0_i32_7 = arith.constant 0 : i32
    %11 = arith.cmpi ne, %10, %c0_i32_7 : i32
    scf.if %11 {
      %c0_8 = arith.constant 0 : index
      %c0_9 = arith.constant 0 : index
      %12 = vector.load %arg8[%c0_8, %c0_9] : memref<2x1024xf32, #tpu.memory_space<vmem>>, vector<2x1024xf32>
      %cst_10 = arith.constant 6.250000e-02 : f32
      %13 = vector.broadcast %cst_10 : f32 to vector<2x1024xf32>
      %14 = arith.mulf %12, %13 : vector<2x1024xf32>
      %c0_11 = arith.constant 0 : index
      %c0_12 = arith.constant 0 : index
      %15 = vector.load %arg3[%c0_11, %c0_12] : memref<1024x256xf32, #tpu.memory_space<vmem>>, vector<1024x256xf32>
      %cst_13 = arith.constant dense<0.000000e+00> : vector<2x256xf32>
      %16 = tpu.matmul %14, %15, %cst_13 {dimension_numbers = #tpu.dot_dimension_numbers<[1], [0], [0], [1], [0, 0, 1, 1], [], []>} : vector<2x1024xf32>, vector<1024x256xf32>, vector<2x256xf32> -> vector<2x256xf32>
      %c0_14 = arith.constant 0 : index
      %c0_15 = arith.constant 0 : index
      %17 = vector.load %arg4[%c0_14, %c0_15] : memref<1x256xf32, #tpu.memory_space<vmem>>, vector<1x256xf32>
      %18 = vector.broadcast %17 : vector<1x256xf32> to vector<2x256xf32>
      %19 = arith.addf %16, %18 : vector<2x256xf32>
      %cst_16 = arith.constant 0.000000e+00 : f32
      %20 = vector.broadcast %cst_16 : f32 to vector<2x256xf32>
      %21 = arith.maximumf %19, %20 : vector<2x256xf32>
      %c0_17 = arith.constant 0 : index
      %c0_18 = arith.constant 0 : index
      %22 = vector.load %arg5[%c0_17, %c0_18] : memref<256x128xf32, #tpu.memory_space<vmem>>, vector<256x128xf32>
      %cst_19 = arith.constant dense<0.000000e+00> : vector<2x128xf32>
      %23 = tpu.matmul %21, %22, %cst_19 {dimension_numbers = #tpu.dot_dimension_numbers<[1], [0], [0], [1], [0, 0, 1, 1], [], []>} : vector<2x256xf32>, vector<256x128xf32>, vector<2x128xf32> -> vector<2x128xf32>
      %c0_20 = arith.constant 0 : index
      %c0_21 = arith.constant 0 : index
      %24 = vector.load %arg6[%c0_20, %c0_21] : memref<1x128xf32, #tpu.memory_space<vmem>>, vector<1x128xf32>
      %25 = vector.broadcast %24 : vector<1x128xf32> to vector<2x128xf32>
      %26 = arith.addf %23, %25 : vector<2x128xf32>
      %c0_22 = arith.constant 0 : index
      %c0_23 = arith.constant 0 : index
      %27 = vector.load %arg7[%c0_22, %c0_23] : memref<2x128xf32, #tpu.memory_space<vmem>>, vector<2x128xf32>
      tpu.vector_store %arg7[%c0_22, %c0_23], %26 {strides = array<i32>} : memref<2x128xf32, #tpu.memory_space<vmem>>, vector<2x128xf32>,
    } else {
    }
    return
  }
  func.func @transform_0(%arg0: i32, %arg1: i32) -> (i32, i32, i32) {
    %c0_i32 = arith.constant 0 : i32
    %c0_i32_0 = arith.constant 0 : i32
    return %arg0, %arg1, %c0_i32 : i32, i32, i32
  }
  func.func @transform_1(%arg0: i32, %arg1: i32) -> (i32, i32) {
    %c0_i32 = arith.constant 0 : i32
    %c0_i32_0 = arith.constant 0 : i32
    %c0_i32_1 = arith.constant 0 : i32
    return %c0_i32, %c0_i32_0 : i32, i32
  }
  func.func @transform_2(%arg0: i32, %arg1: i32) -> (i32, i32) {
    %c0_i32 = arith.constant 0 : i32
    %c0_i32_0 = arith.constant 0 : i32
    %c0_i32_1 = arith.constant 0 : i32
    return %c0_i32, %c0_i32_0 : i32, i32
  }
  func.func @transform_3(%arg0: i32, %arg1: i32) -> (i32, i32) {
    %c0_i32 = arith.constant 0 : i32
    %c0_i32_0 = arith.constant 0 : i32
    %c0_i32_1 = arith.constant 0 : i32
    return %c0_i32, %c0_i32_0 : i32, i32
  }
  func.func @transform_4(%arg0: i32, %arg1: i32) -> (i32, i32) {
    %c0_i32 = arith.constant 0 : i32
    %c0_i32_0 = arith.constant 0 : i32
    %c0_i32_1 = arith.constant 0 : i32
    return %c0_i32, %c0_i32_0 : i32, i32
  }
  func.func @transform_5(%arg0: i32, %arg1: i32) -> (i32, i32) {
    %c0_i32 = arith.constant 0 : i32
    %c0_i32_0 = arith.constant 0 : i32
    return %arg0, %c0_i32 : i32, i32
  }
}

</mosaic_0001>

<llo_original>
// kernel: tpu_custom_call.1
$region0: #{tpu_custom_call.1}
  #allocation0 [shape = 'u32[]', space=smem, size = 0x4, offset = 0x4, fixed_abs, tag = 'smem constant byte address 0x4 - core index']
  #allocation1 [shape = 'u32[144,128]{1,0:T(1,128)}', space=vmem, size = 0x12000, scoped, tag = 'internal scratch']
  #allocation2 [shape = 'f32[2,1024]{1,0:T(2,128)}', space=vmem, size = 0x2000, scoped, tag = 'scratch operand']
  %s0 = inlined_call_operand.hbm [shape: bf16[2,16,1024], index: 0, kind: input, shape index: {}]
  %s1 = inlined_call_operand.hbm [shape: f32[1024,256], index: 1, kind: input, shape index: {}]
  %s2 = inlined_call_operand.vmem [shape: f32[1,256], index: 2, kind: input, shape index: {}]
  %s3 = inlined_call_operand.hbm [shape: f32[256,128], index: 3, kind: input, shape index: {}]
  %s4 = inlined_call_operand.vmem [shape: f32[1,128], index: 4, kind: input, shape index: {}]
  %s5 = inlined_call_operand.hbm [shape: f32[2,128], index: 5, kind: output, shape index: {}]
  %s6 = sld [smem:[#allocation0]]
  $region73: #{tpu_custom_call.1} parent=0
    _
  %s8 = ssub.s32 1, %s6
  %s9 = scalar_select 0, %s8, %s6
  $region1: #{tpu_custom_call.1} parent=0
    #allocation3 [shape = 'u8[65536]{0}', space=vmem, size = 0x10000, scoped, tag = 'input window, operand 0']
    #allocation4 [shape = 's32[2]{0}', space=sflag, size = 0x8, scoped, tag = 'scoped memory for tpu_custom_call.1']
    #allocation5 [shape = 's32[2]{0}', space=sflag, size = 0x8, scoped, tag = 'scoped memory for tpu_custom_call.1']
    #allocation6 [shape = 'u8[1048576]{0}', space=vmem, size = 0x100000, scoped, tag = 'input window, operand 1, single buffered']
    #allocation7 [shape = 's32[1]{0}', space=sflag, size = 0x4, scoped, tag = 'scoped memory for tpu_custom_call.1']
    #allocation8 [shape = 'u8[131072]{0}', space=vmem, size = 0x20000, scoped, tag = 'input window, operand 3, single buffered']
    #allocation9 [shape = 'u8[1024]{0}', space=vmem, size = 0x400, scoped, tag = 'output window, operand 0, single buffered']
    %10 = vsyncpa [#allocation4], 0
    %s11 = scalar_lea.sflag [#allocation4], 1
    %12 = vsyncpa %s11, 0
    %13 = vsyncpa [#allocation7], 0
    %14 = vsyncpa [#allocation5], 0
    loop: start=0, step=1, limit=4
    $region2: #{tpu_custom_call.1} parent=1 // loop_pre_header
      _
    $region3: #{tpu_custom_call.1} parent=1 // loop_header
      %s16 = sphi 0, %s20
      %p17 = scmp.ge.s32.totalorder %s16, 4
      %s23 = sphi 0, %s35
      %s24 = sphi 0, %s31
      %s25 = sphi 0, %s23
      %s26 = sphi 0, %s24
      %s27 = sphi 0, %s25
      %s28 = sphi 0, %s26
      %s40 = sphi 0, %s42
      %s43 = sphi 0, %s40
      %s44 = sphi 0, %s43
      %s60 = sphi 0, %s44
      %s64 = sphi 0, %s64
      %s66 = sphi 0, %s64
      %s67 = sphi 0, %s66
      %s81 = sphi 0, %s67
      %s85 = sphi 0, %s85
      %s87 = sphi 0, %s85
      %s88 = sphi 0, %s87
      %s102 = sphi 0, %s88
      %s106 = sphi 0, %s106
      %s108 = sphi 0, %s106
      %s109 = sphi 0, %s108
      %s123 = sphi 0, %s109
      %s127 = sphi 0, %s127
      %s129 = sphi 0, %s127
      %s130 = sphi 0, %s129
      %s144 = sphi 0, %s130
      %s150 = sphi 0, %s152
      %s153 = sphi 0, %s150
      %s154 = sphi 0, %s153
      %s170 = sphi 0, %s154
    $region4: #{tpu_custom_call.1} parent=1 // loop_header_branch
      %19 = sbr.rel (%p17) target = $region8
    $region5: #{tpu_custom_call.1} parent=1 // loop_body
      %s21 = ssub.s32 %s16, 1
      %s22 = ssub.s32 %s16, 2
      %s29 = sadd.s32 1, %s24
      %p30 = scmp.ge.s32.totalorder %s29, 2
      %s31 = scalar_select %p30, 0, %s29
      %s32 = sadd.s32 1, %s23
      %s33 = scalar_select %p30, %s32, %s23
      %p34 = scmp.ge.s32.totalorder %s33, 1
      %s35 = scalar_select %p34, 0, %s33
      %s36 = ssub.s32 %s23, %s35
      %s37 = ssub.s32 %s24, %s31
      %s38 = sor.u32 %s36, %s37
      %p39 = scmp.eq.s32.totalorder %s38, 0
      %s41 = sadd.s32 %s40, 1
      %s42 = scalar_select %p39, %s40, %s41
      %p45 = pneg %p39
      %p46 = scmp.eq.s32.totalorder %s16, 1
      %p47 = por %p45, %p46
      %p48 = scmp.ne.s32.totalorder %s40, %s43
      %p49 = scmp.eq.s32.totalorder %s16, 0
      %p50 = por %p48, %p49
      %p51 = scmp.ne.s32.totalorder %s40, %s43
      %p52 = scmp.eq.s32.totalorder %s21, 1
      %p53 = por %p51, %p52
      %p54 = scmp.ne.s32.totalorder %s43, %s44
      %p55 = scmp.eq.s32.totalorder %s21, 0
      %p56 = por %p54, %p55
      %p57 = scmp.ne.s32.totalorder %s43, %s44
      %p58 = scmp.eq.s32.totalorder %s22, 1
      %p59 = por %p57, %p58
      %p61 = scmp.ne.s32.totalorder %s44, %s60
      %p62 = scmp.eq.s32.totalorder %s22, 0
      %p63 = por %p61, %p62
      %s65 = sadd.s32 %s64, 1
      %p68 = scmp.eq.s32.totalorder %s16, 1
      %p69 = scmp.ne.s32.totalorder %s64, %s66
      %p70 = scmp.eq.s32.totalorder %s16, 0
      %p71 = por %p69, %p70
      %p72 = scmp.ne.s32.totalorder %s64, %s66
      %p73 = scmp.eq.s32.totalorder %s21, 1
      %p74 = por %p72, %p73
      %p75 = scmp.ne.s32.totalorder %s66, %s67
      %p76 = scmp.eq.s32.totalorder %s21, 0
      %p77 = por %p75, %p76
      %p78 = scmp.ne.s32.totalorder %s66, %s67
      %p79 = scmp.eq.s32.totalorder %s22, 1
      %p80 = por %p78, %p79
      %p82 = scmp.ne.s32.totalorder %s67, %s81
      %p83 = scmp.eq.s32.totalorder %s22, 0
      %p84 = por %p82, %p83
      %s86 = sadd.s32 %s85, 1
      %p89 = scmp.eq.s32.totalorder %s16, 1
      %p90 = scmp.ne.s32.totalorder %s85, %s87
      %p91 = scmp.eq.s32.totalorder %s16, 0
      %p92 = por %p90, %p91
      %p93 = scmp.ne.s32.totalorder %s85, %s87
      %p94 = scmp.eq.s32.totalorder %s21, 1
      %p95 = por %p93, %p94
      %p96 = scmp.ne.s32.totalorder %s87, %s88
      %p97 = scmp.eq.s32.totalorder %s21, 0
      %p98 = por %p96, %p97
      %p99 = scmp.ne.s32.totalorder %s87, %s88
      %p100 = scmp.eq.s32.totalorder %s22, 1
      %p101 = por %p99, %p100
      %p103 = scmp.ne.s32.totalorder %s88, %s102
      %p104 = scmp.eq.s32.totalorder %s22, 0
      %p105 = por %p103, %p104
      %s107 = sadd.s32 %s106, 1
      %p110 = scmp.eq.s32.totalorder %s16, 1
      %p111 = scmp.ne.s32.totalorder %s106, %s108
      %p112 = scmp.eq.s32.totalorder %s16, 0
      %p113 = por %p111, %p112
      %p114 = scmp.ne.s32.totalorder %s106, %s108
      %p115 = scmp.eq.s32.totalorder %s21, 1
      %p116 = por %p114, %p115
      %p117 = scmp.ne.s32.totalorder %s108, %s109
      %p118 = scmp.eq.s32.totalorder %s21, 0
      %p119 = por %p117, %p118
      %p120 = scmp.ne.s32.totalorder %s108, %s109
      %p121 = scmp.eq.s32.totalorder %s22, 1
      %p122 = por %p120, %p121
      %p124 = scmp.ne.s32.totalorder %s109, %s123
      %p125 = scmp.eq.s32.totalorder %s22, 0
      %p126 = por %p124, %p125
      %s128 = sadd.s32 %s127, 1
      %p131 = scmp.eq.s32.totalorder %s16, 1
      %p132 = scmp.ne.s32.totalorder %s127, %s129
      %p133 = scmp.eq.s32.totalorder %s16, 0
      %p134 = por %p132, %p133
      %p135 = scmp.ne.s32.totalorder %s127, %s129
      %p136 = scmp.eq.s32.totalorder %s21, 1
      %p137 = por %p135, %p136
      %p138 = scmp.ne.s32.totalorder %s129, %s130
      %p139 = scmp.eq.s32.totalorder %s21, 0
      %p140 = por %p138, %p139
      %p141 = scmp.ne.s32.totalorder %s129, %s130
      %p142 = scmp.eq.s32.totalorder %s22, 1
      %p143 = por %p141, %p142
      %p145 = scmp.ne.s32.totalorder %s130, %s144
      %p146 = scmp.eq.s32.totalorder %s22, 0
      %p147 = por %p145, %p146
      %s148 = ssub.s32 %s23, %s35
      %p149 = scmp.eq.s32.totalorder %s148, 0
      %s151 = sadd.s32 %s150, 1
      %s152 = scalar_select %p149, %s150, %s151
      %p155 = pneg %p149
      %p156 = scmp.eq.s32.totalorder %s16, 1
      %p157 = por %p155, %p156
      %p158 = scmp.ne.s32.totalorder %s150, %s153
      %p159 = scmp.eq.s32.totalorder %s16, 0
      %p160 = por %p158, %p159
      %p161 = scmp.ne.s32.totalorder %s150, %s153
      %p162 = scmp.eq.s32.totalorder %s21, 1
      %p163 = por %p161, %p162
      %p164 = scmp.ne.s32.totalorder %s153, %s154
      %p165 = scmp.eq.s32.totalorder %s21, 0
      %p166 = por %p164, %p165
      %p167 = scmp.ne.s32.totalorder %s153, %s154
      %p168 = scmp.eq.s32.totalorder %s22, 1
      %p169 = por %p167, %p168
      %p171 = scmp.ne.s32.totalorder %s154, %s170
      %p172 = scmp.eq.s32.totalorder %s22, 0
      %p173 = por %p171, %p172
      %p174 = scmp.le.s32.totalorder 1, %s16
      %p175 = scmp.lt.s32.totalorder %s16, 3
      %p176 = pnand %p174, %p175
      %p177 = pneg %p176
      // Predicated region
      $region9: #{tpu_custom_call.1} parent=5 // pred_check
        _
      $region10: #{tpu_custom_call.1} parent=5 // pred_check_branch
        %179 = sbr.rel (%p176) target = $region12
      $region11: #{tpu_custom_call.1} parent=5 // pred_region
        %s180 = ssub.s32 %s16, 1
        // Predicated region
        $region13: #{tpu_custom_call.1} parent=11 // pred_check
          %p181 = pneg %p77
        $region14: #{tpu_custom_call.1} parent=11 // pred_check_branch
          %183 = sbr.rel (%p181) target = $region16
        $region15: #{tpu_custom_call.1} parent=11 // pred_region
          %s185 = ssub.s32 32768, 32768
          %186 = vsyncadd [#allocation7], %s185
          %s187 = sshll.u32 [#allocation6], 4
          %s188 = int_to_ptr.vmem [resolvable:$true] %s187
          %193 = dma.hbm_to_vmem [thread:$0]  %s1, 32768, %s188, [#allocation7], 256, 256, 16
        $region16: #{tpu_custom_call.1} parent=11 // pred_fallthru
          _
        // Predicated region
        $region17: #{tpu_custom_call.1} parent=11 // pred_check
          %p194 = pneg %p98
        $region18: #{tpu_custom_call.1} parent=11 // pred_check_branch
          %196 = sbr.rel (%p194) target = $region20
        $region19: #{tpu_custom_call.1} parent=11 // pred_region
          _
        $region20: #{tpu_custom_call.1} parent=11 // pred_fallthru
          _
        // Predicated region
        $region21: #{tpu_custom_call.1} parent=11 // pred_check
          %p197 = pneg %p119
        $region22: #{tpu_custom_call.1} parent=11 // pred_check_branch
          %199 = sbr.rel (%p197) target = $region24
        $region23: #{tpu_custom_call.1} parent=11 // pred_region
          %s201 = ssub.s32 4096, 4096
          %202 = vsyncadd [#allocation7], %s201
          %s203 = sshll.u32 [#allocation8], 4
          %s204 = int_to_ptr.vmem [resolvable:$true] %s203
          %209 = dma.hbm_to_vmem [thread:$0]  %s3, 4096, %s204, [#allocation7], 128, 128, 8
        $region24: #{tpu_custom_call.1} parent=11 // pred_fallthru
          _
        // Predicated region
        $region25: #{tpu_custom_call.1} parent=11 // pred_check
          %p210 = pneg %p140
        $region26: #{tpu_custom_call.1} parent=11 // pred_check_branch
          %212 = sbr.rel (%p210) target = $region28
        $region27: #{tpu_custom_call.1} parent=11 // pred_region
          _
        $region28: #{tpu_custom_call.1} parent=11 // pred_fallthru
          _
      $region12: #{tpu_custom_call.1} parent=5 // pred_fallthru
        _
      %p213 = scmp.lt.s32.totalorder %s16, 2
      // Predicated region
      $region29: #{tpu_custom_call.1} parent=5 // pred_check
        %p214 = pneg %p213
      $region30: #{tpu_custom_call.1} parent=5 // pred_check_branch
        %216 = sbr.rel (%p214) target = $region32
      $region31: #{tpu_custom_call.1} parent=5 // pred_region
        // Predicated region
        $region33: #{tpu_custom_call.1} parent=31 // pred_check
          %p217 = pneg %p50
        $region34: #{tpu_custom_call.1} parent=31 // pred_check_branch
          %219 = sbr.rel (%p217) target = $region36
        $region35: #{tpu_custom_call.1} parent=31 // pred_region
          %s220 = sand.u32 %s40, 1
          %s221 = scalar_lea.sflag [#allocation4], %s220
          %s222 = sand.u32 %s40, 1
          %s223 = smul.addr %s222, 64
          %s224 = scalar_lea.vmem [#allocation3], %s223
          %s225 = smul.u32 2, %s23
          %s227 = ssub.s32 1024, 1024
          %228 = vsyncadd %s221, %s227
          %s229 = smul.addr %s24, 8
          %s230 = smul.addr %s225, 16
          %s231 = sadd.s32 %s229, %s230
          %s232 = smul.addr %s231, 64
          %s233 = scalar_lea.hbm %s0, %s232
          %s234 = sshll.u32 %s224, 4
          %s235 = int_to_ptr.vmem [resolvable:$true] %s234
          %240 = dma.hbm_to_vmem [thread:$0]  %s233, 1024, %s235, %s221, 1024, 512, 32
        $region36: #{tpu_custom_call.1} parent=31 // pred_fallthru
          _
      $region32: #{tpu_custom_call.1} parent=5 // pred_fallthru
        _
      %p241 = scmp.le.s32.totalorder 1, %s16
      %p242 = scmp.lt.s32.totalorder %s16, 3
      %p243 = pnand %p241, %p242
      %p244 = pneg %p243
      // Predicated region
      $region37: #{tpu_custom_call.1} parent=5 // pred_check
        _
      $region38: #{tpu_custom_call.1} parent=5 // pred_check_branch
        %246 = sbr.rel (%p243) target = $region40
      $region39: #{tpu_custom_call.1} parent=5 // pred_region
        %s247 = ssub.s32 %s16, 1
        %s248 = sand.u32 %s43, 1
        %s249 = scalar_lea.sflag [#allocation4], %s248
        %s250 = sand.u32 %s43, 1
        %s251 = smul.addr %s250, 64
        %s252 = scalar_lea.vmem [#allocation3], %s251
        // Predicated region
        $region41: #{tpu_custom_call.1} parent=39 // pred_check
          %p253 = pneg %p56
        $region42: #{tpu_custom_call.1} parent=39 // pred_check_branch
          %255 = sbr.rel (%p253) target = $region44
        $region43: #{tpu_custom_call.1} parent=39 // pred_region
          %256 = dma.done %s249, 1024
        $region44: #{tpu_custom_call.1} parent=39 // pred_fallthru
          _
        // Predicated region
        $region45: #{tpu_custom_call.1} parent=39 // pred_check
          %p257 = pneg %p77
        $region46: #{tpu_custom_call.1} parent=39 // pred_check_branch
          %259 = sbr.rel (%p257) target = $region48
        $region47: #{tpu_custom_call.1} parent=39 // pred_region
          %260 = dma.done [#allocation7], 32768
        $region48: #{tpu_custom_call.1} parent=39 // pred_fallthru
          _
        // Predicated region
        $region49: #{tpu_custom_call.1} parent=39 // pred_check
          %p261 = pneg %p119
        $region50: #{tpu_custom_call.1} parent=39 // pred_check_branch
          %263 = sbr.rel (%p261) target = $region52
        $region51: #{tpu_custom_call.1} parent=39 // pred_region
          %264 = dma.done [#allocation7], 4096
        $region52: #{tpu_custom_call.1} parent=39 // pred_fallthru
          _
        %s265 = sand.u32 %s43, 1
        %s266 = scalar_lea.sflag [#allocation4], %s265
        %s267 = sand.u32 %s43, 1
        %s268 = smul.addr %s267, 64
        %s269 = scalar_lea.vmem [#allocation3], %s268
        %p270 = pneg %p56
        %p271 = pneg %p53
        %p272 = pneg %p77
        %p273 = pneg %p74
        %p274 = pneg %p98
        %p275 = pneg %p95
        %p276 = pneg %p119
        %p277 = pneg %p116
        %p278 = pneg %p140
        %p279 = pneg %p137
        %p280 = pneg %p166
        %p281 = pneg %p163
        %s282 = smul.u32 2, %s25
        %p283 = scmp.eq.s32.totalorder %s26, 0
        // Predicated region
        $region53: #{tpu_custom_call.1} parent=39 // pred_check
          %p284 = pneg %p283
        $region54: #{tpu_custom_call.1} parent=39 // pred_check_branch
          %286 = sbr.rel (%p284) target = $region56
        $region55: #{tpu_custom_call.1} parent=39 // pred_region
          %287 = vst [vmem:[#allocation2] sm:$0xff] 0.0
          %288 = vst [vmem:[#allocation2 + $0x8] sm:$0xff] 0.0
        $region56: #{tpu_custom_call.1} parent=39 // pred_fallthru
          _
        %v289 = vld [vmem:[#allocation2] sm:$0xff]
        %v290 = vld [vmem:[#allocation2 + $0x8] sm:$0xff]
        %v291 = vld [vmem:[%s252] sm:$0xff]
        %v292 = vld [vmem:[%s252 + $0x8] sm:$0xff]
        %v293 = vld [vmem:[%s252 + $0x10] sm:$0xff]
        %v294 = vld [vmem:[%s252 + $0x18] sm:$0xff]
        %v295 = vld [vmem:[%s252 + $0x20] sm:$0xff]
        %v296 = vld [vmem:[%s252 + $0x28] sm:$0xff]
        %v297 = vld [vmem:[%s252 + $0x30] sm:$0xff]
        %v298 = vld [vmem:[%s252 + $0x38] sm:$0xff]
        %v299 = vunpack.c.l.bf16 %v291
        %v300 = vunpack.c.h.bf16 %v291
        %v301 = vunpack.c.l.bf16 %v292
        %v302 = vunpack.c.h.bf16 %v292
        %v303 = vunpack.c.l.bf16 %v293
        %v304 = vunpack.c.h.bf16 %v293
        %v305 = vunpack.c.l.bf16 %v294
        %v306 = vunpack.c.h.bf16 %v294
        %v307 = vunpack.c.l.bf16 %v295
        %v308 = vunpack.c.h.bf16 %v295
        %v309 = vunpack.c.l.bf16 %v296
        %v310 = vunpack.c.h.bf16 %v296
        %v311 = vunpack.c.l.bf16 %v297
        %v312 = vunpack.c.h.bf16 %v297
        %v313 = vunpack.c.l.bf16 %v298
        %v314 = vunpack.c.h.bf16 %v298
        %v315 = vrot.slane %v299, 4
        %v316 = vadd.f32 %v299, %v315
        %v317 = vrot.slane %v316, 2
        %v318 = vadd.f32 %v316, %v317
        %v319 = vrot.slane %v318, 1
        %v320 = vadd.f32 %v318, %v319
        %v321 = vrot.slane %v300, 4
        %v322 = vadd.f32 %v300, %v321
        %v323 = vrot.slane %v322, 2
        %v324 = vadd.f32 %v322, %v323
        %v325 = vrot.slane %v324, 1
        %v326 = vadd.f32 %v324, %v325
        %v327 = vrot.slane %v301, 4
        %v328 = vadd.f32 %v301, %v327
        %v329 = vrot.slane %v328, 2
        %v330 = vadd.f32 %v328, %v329
        %v331 = vrot.slane %v330, 1
        %v332 = vadd.f32 %v330, %v331
        %v333 = vrot.slane %v302, 4
        %v334 = vadd.f32 %v302, %v333
        %v335 = vrot.slane %v334, 2
        %v336 = vadd.f32 %v334, %v335
        %v337 = vrot.slane %v336, 1
        %v338 = vadd.f32 %v336, %v337
        %v339 = vrot.slane %v303, 4
        %v340 = vadd.f32 %v303, %v339
        %v341 = vrot.slane %v340, 2
        %v342 = vadd.f32 %v340, %v341
        %v343 = vrot.slane %v342, 1
        %v344 = vadd.f32 %v342, %v343
        %v345 = vrot.slane %v304, 4
        %v346 = vadd.f32 %v304, %v345
        %v347 = vrot.slane %v346, 2
        %v348 = vadd.f32 %v346, %v347
        %v349 = vrot.slane %v348, 1
        %v350 = vadd.f32 %v348, %v349
        %v351 = vrot.slane %v305, 4
        %v352 = vadd.f32 %v305, %v351
        %v353 = vrot.slane %v352, 2
        %v354 = vadd.f32 %v352, %v353
        %v355 = vrot.slane %v354, 1
        %v356 = vadd.f32 %v354, %v355
        %v357 = vrot.slane %v306, 4
        %v358 = vadd.f32 %v306, %v357
        %v359 = vrot.slane %v358, 2
        %v360 = vadd.f32 %v358, %v359
        %v361 = vrot.slane %v360, 1
        %v362 = vadd.f32 %v360, %v361
        %v363 = vrot.slane %v307, 4
        %v364 = vadd.f32 %v307, %v363
        %v365 = vrot.slane %v364, 2
        %v366 = vadd.f32 %v364, %v365
        %v367 = vrot.slane %v366, 1
        %v368 = vadd.f32 %v366, %v367
        %v369 = vrot.slane %v308, 4
        %v370 = vadd.f32 %v308, %v369
        %v371 = vrot.slane %v370, 2
        %v372 = vadd.f32 %v370, %v371
        %v373 = vrot.slane %v372, 1
        %v374 = vadd.f32 %v372, %v373
        %v375 = vrot.slane %v309, 4
        %v376 = vadd.f32 %v309, %v375
        %v377 = vrot.slane %v376, 2
        %v378 = vadd.f32 %v376, %v377
        %v379 = vrot.slane %v378, 1
        %v380 = vadd.f32 %v378, %v379
        %v381 = vrot.slane %v310, 4
        %v382 = vadd.f32 %v310, %v381
        %v383 = vrot.slane %v382, 2
        %v384 = vadd.f32 %v382, %v383
        %v385 = vrot.slane %v384, 1
        %v386 = vadd.f32 %v384, %v385
        %v387 = vrot.slane %v311, 4
        %v388 = vadd.f32 %v311, %v387
        %v389 = vrot.slane %v388, 2
        %v390 = vadd.f32 %v388, %v389
        %v391 = vrot.slane %v390, 1
        %v392 = vadd.f32 %v390, %v391
        %v393 = vrot.slane %v312, 4
        %v394 = vadd.f32 %v312, %v393
        %v395 = vrot.slane %v394, 2
        %v396 = vadd.f32 %v394, %v395
        %v397 = vrot.slane %v396, 1
        %v398 = vadd.f32 %v396, %v397
        %v399 = vrot.slane %v313, 4
        %v400 = vadd.f32 %v313, %v399
        %v401 = vrot.slane %v400, 2
        %v402 = vadd.f32 %v400, %v401
        %v403 = vrot.slane %v402, 1
        %v404 = vadd.f32 %v402, %v403
        %v405 = vrot.slane %v314, 4
        %v406 = vadd.f32 %v314, %v405
        %v407 = vrot.slane %v406, 2
        %v408 = vadd.f32 %v406, %v407
        %v409 = vrot.slane %v408, 1
        %v410 = vadd.f32 %v408, %v409
        %v427 = vcombine.low %v320, %v326
        %v428 = vcombine.low %v332, %v338
        %v430 = vunpack.c.l.s4 1983009808
        %v431 = vunpack.c.0.s8 %v430
        %v432 = vlaneseq
        %v433 = vshrl.u32 %v432, 7
        %v434 = vsub.s32 %v431, %v433
        %v435 = vrot.slane %v427, %v434
        %v437 = vunpack.c.l.s4 1983009808
        %v438 = vunpack.c.0.s8 %v437
        %v439 = vlaneseq
        %v440 = vshrl.u32 %v439, 7
        %v441 = vsub.s32 %v438, %v440
        %v442 = vrot.slane %v428, %v441
        %v443 = vcombine.low %v435, %v442
        %v444 = vcombine.low %v344, %v350
        %v445 = vcombine.low %v356, %v362
        %v447 = vunpack.c.l.s4 1983009808
        %v448 = vunpack.c.0.s8 %v447
        %v449 = vlaneseq
        %v450 = vshrl.u32 %v449, 7
        %v451 = vsub.s32 %v448, %v450
        %v452 = vrot.slane %v444, %v451
        %v454 = vunpack.c.l.s4 1983009808
        %v455 = vunpack.c.0.s8 %v454
        %v456 = vlaneseq
        %v457 = vshrl.u32 %v456, 7
        %v458 = vsub.s32 %v455, %v457
        %v459 = vrot.slane %v445, %v458
        %v460 = vcombine.low %v452, %v459
        %v461 = vcombine.low %v368, %v374
        %v462 = vcombine.low %v380, %v386
        %v464 = vunpack.c.l.s4 1983009808
        %v465 = vunpack.c.0.s8 %v464
        %v466 = vlaneseq
        %v467 = vshrl.u32 %v466, 7
        %v468 = vsub.s32 %v465, %v467
        %v469 = vrot.slane %v461, %v468
        %v471 = vunpack.c.l.s4 1983009808
        %v472 = vunpack.c.0.s8 %v471
        %v473 = vlaneseq
        %v474 = vshrl.u32 %v473, 7
        %v475 = vsub.s32 %v472, %v474
        %v476 = vrot.slane %v462, %v475
        %v477 = vcombine.low %v469, %v476
        %v478 = vcombine.low %v392, %v398
        %v479 = vcombine.low %v404, %v410
        %v481 = vunpack.c.l.s4 1983009808
        %v482 = vunpack.c.0.s8 %v481
        %v483 = vlaneseq
        %v484 = vshrl.u32 %v483, 7
        %v485 = vsub.s32 %v482, %v484
        %v486 = vrot.slane %v478, %v485
        %v488 = vunpack.c.l.s4 1983009808
        %v489 = vunpack.c.0.s8 %v488
        %v490 = vlaneseq
        %v491 = vshrl.u32 %v490, 7
        %v492 = vsub.s32 %v489, %v491
        %v493 = vrot.slane %v479, %v492
        %v494 = vcombine.low %v486, %v493
        %vm495 = vcmask 1044484
        %v496 = vsel %vm495, %v443, %v443
        %vm497 = vcmask 1046534
        %v498 = vsel %vm497, %v443, %v496
        %v499 = vrot.slane %v477, 7
        %vm500 = vcmask 1041409
        %v501 = vsel %vm500, %v499, %v498
        %vm502 = vcmask 1043459
        %v503 = vsel %vm502, %v499, %v501
        %vm504 = vcmask 1045509
        %v505 = vsel %vm504, %v499, %v503
        %vm506 = vcmask 1047559
        %v507 = vsel %vm506, %v499, %v505
        %v508 = vsel %vm495, %v460, %v460
        %v509 = vsel %vm497, %v460, %v508
        %v510 = vrot.slane %v494, 7
        %v511 = vsel %vm500, %v510, %v509
        %v512 = vsel %vm502, %v510, %v511
        %v513 = vsel %vm504, %v510, %v512
        %v514 = vsel %vm506, %v510, %v513
        %v517 = vadd.f32 %v289, %v507
        %v518 = vadd.f32 %v290, %v514
        %519 = vst [vmem:[#allocation2] sm:$0xff] %v517
        %520 = vst [vmem:[#allocation2 + $0x8] sm:$0xff] %v518
        %p521 = scmp.eq.s32.totalorder %s26, 1
        // Predicated region
        $region57: #{tpu_custom_call.1} parent=39 // pred_check
          %p522 = pneg %p521
        $region58: #{tpu_custom_call.1} parent=39 // pred_check_branch
          %524 = sbr.rel (%p522) target = $region60
        $region59: #{tpu_custom_call.1} parent=39 // pred_region
          %v525 = vld [vmem:[#allocation2] sm:$0xff]
          %v526 = vld [vmem:[#allocation2 + $0x8] sm:$0xff]
          %v527 = vmul.f32 %v525, 0.0625
          %v528 = vmul.f32 %v526, 0.0625
          %v529 = vld [vmem:[#allocation6] sm:$0xff]
          %v530 = vld [vmem:[#allocation6 + $0x8] sm:$0xff]
          %v531 = vld [vmem:[#allocation6 + $0x10] sm:$0xff]
          %v532 = vld [vmem:[#allocation6 + $0x18] sm:$0xff]
          %v533 = vld [vmem:[#allocation6 + $0x20] sm:$0xff]
          %v534 = vld [vmem:[#allocation6 + $0x28] sm:$0xff]
          %v535 = vld [vmem:[#allocation6 + $0x30] sm:$0xff]
          %v536 = vld [vmem:[#allocation6 + $0x38] sm:$0xff]
          %v537 = vld [vmem:[#allocation6 + $0x40] sm:$0xff]
          %v538 = vld [vmem:[#allocation6 + $0x48] sm:$0xff]
          %v539 = vld [vmem:[#allocation6 + $0x50] sm:$0xff]
          %v540 = vld [vmem:[#allocation6 + $0x58] sm:$0xff]
          %v541 = vld [vmem:[#allocation6 + $0x60] sm:$0xff]
          %v542 = vld [vmem:[#allocation6 + $0x68] sm:$0xff]
          %v543 = vld [vmem:[#allocation6 + $0x70] sm:$0xff]
          %v544 = vld [vmem:[#allocation6 + $0x78] sm:$0xff]
          %v545 = vld [vmem:[#allocation6 + $0x80] sm:$0xff]
          %v546 = vld [vmem:[#allocation6 + $0x88] sm:$0xff]
          %v547 = vld [vmem:[#allocation6 + $0x90] sm:$0xff]
          %v548 = vld [vmem:[#allocation6 + $0x98] sm:$0xff]
          %v549 = vld [vmem:[#allocation6 + $0xa0] sm:$0xff]
          %v550 = vld [vmem:[#allocation6 + $0xa8] sm:$0xff]
          %v551 = vld [vmem:[#allocation6 + $0xb0] sm:$0xff]
          %v552 = vld [vmem:[#allocation6 + $0xb8] sm:$0xff]
          %v553 = vld [vmem:[#allocation6 + $0xc0] sm:$0xff]
          %v554 = vld [vmem:[#allocation6 + $0xc8] sm:$0xff]
          %v555 = vld [vmem:[#allocation6 + $0xd0] sm:$0xff]
          %v556 = vld [vmem:[#allocation6 + $0xd8] sm:$0xff]
          %v557 = vld [vmem:[#allocation6 + $0xe0] sm:$0xff]
          %v558 = vld [vmem:[#allocation6 + $0xe8] sm:$0xff]
          %v559 = vld [vmem:[#allocation6 + $0xf0] sm:$0xff]
          %v560 = vld [vmem:[#allocation6 + $0xf8] sm:$0xff]
          %v561 = vld [vmem:[#allocation6 + $0x100] sm:$0xff]
          %v562 = vld [vmem:[#allocation6 + $0x108] sm:$0xff]
          %v563 = vld [vmem:[#allocation6 + $0x110] sm:$0xff]
          %v564 = vld [vmem:[#allocation6 + $0x118] sm:$0xff]
          %v565 = vld [vmem:[#allocation6 + $0x120] sm:$0xff]
          %v566 = vld [vmem:[#allocation6 + $0x128] sm:$0xff]
          %v567 = vld [vmem:[#allocation6 + $0x130] sm:$0xff]
          %v568 = vld [vmem:[#allocation6 + $0x138] sm:$0xff]
          %v569 = vld [vmem:[#allocation6 + $0x140] sm:$0xff]
          %v570 = vld [vmem:[#allocation6 + $0x148] sm:$0xff]
          %v571 = vld [vmem:[#allocation6 + $0x150] sm:$0xff]
          %v572 = vld [vmem:[#allocation6 + $0x158] sm:$0xff]
          %v573 = vld [vmem:[#allocation6 + $0x160] sm:$0xff]
          %v574 = vld [vmem:[#allocation6 + $0x168] sm:$0xff]
          %v575 = vld [vmem:[#allocation6 + $0x170] sm:$0xff]
          %v576 = vld [vmem:[#allocation6 + $0x178] sm:$0xff]
          %v577 = vld [vmem:[#allocation6 + $0x180] sm:$0xff]
          %v578 = vld [vmem:[#allocation6 + $0x188] sm:$0xff]
          %v579 = vld [vmem:[#allocation6 + $0x190] sm:$0xff]
          %v580 = vld [vmem:[#allocation6 + $0x198] sm:$0xff]
          %v581 = vld [vmem:[#allocation6 + $0x1a0] sm:$0xff]
          %v582 = vld [vmem:[#allocation6 + $0x1a8] sm:$0xff]
          %v583 = vld [vmem:[#allocation6 + $0x1b0] sm:$0xff]
          %v584 = vld [vmem:[#allocation6 + $0x1b8] sm:$0xff]
          %v585 = vld [vmem:[#allocation6 + $0x1c0] sm:$0xff]
          %v586 = vld [vmem:[#allocation6 + $0x1c8] sm:$0xff]
          %v587 = vld [vmem:[#allocation6 + $0x1d0] sm:$0xff]
          %v588 = vld [vmem:[#allocation6 + $0x1d8] sm:$0xff]
          %v589 = vld [vmem:[#allocation6 + $0x1e0] sm:$0xff]
          %v590 = vld [vmem:[#allocation6 + $0x1e8] sm:$0xff]
          %v591 = vld [vmem:[#allocation6 + $0x1f0] sm:$0xff]
          %v592 = vld [vmem:[#allocation6 + $0x1f8] sm:$0xff]
          %v593 = vld [vmem:[#allocation6 + $0x200] sm:$0xff]
          %v594 = vld [vmem:[#allocation6 + $0x208] sm:$0xff]
          %v595 = vld [vmem:[#allocation6 + $0x210] sm:$0xff]
          %v596 = vld [vmem:[#allocation6 + $0x218] sm:$0xff]
          %v597 = vld [vmem:[#allocation6 + $0x220] sm:$0xff]
          %v598 = vld [vmem:[#allocation6 + $0x228] sm:$0xff]
          %v599 = vld [vmem:[#allocation6 + $0x230] sm:$0xff]
          %v600 = vld [vmem:[#allocation6 + $0x238] sm:$0xff]
          %v601 = vld [vmem:[#allocation6 + $0x240] sm:$0xff]
          %v602 = vld [vmem:[#allocation6 + $0x248] sm:$0xff]
          %v603 = vld [vmem:[#allocation6 + $0x250] sm:$0xff]
          %v604 = vld [vmem:[#allocation6 + $0x258] sm:$0xff]
          %v605 = vld [vmem:[#allocation6 + $0x260] sm:$0xff]
          %v606 = vld [vmem:[#allocation6 + $0x268] sm:$0xff]
          %v607 = vld [vmem:[#allocation6 + $0x270] sm:$0xff]
          %v608 = vld [vmem:[#allocation6 + $0x278] sm:$0xff]
          %v609 = vld [vmem:[#allocation6 + $0x280] sm:$0xff]
          %v610 = vld [vmem:[#allocation6 + $0x288] sm:$0xff]
          %v611 = vld [vmem:[#allocation6 + $0x290] sm:$0xff]
          %v612 = vld [vmem:[#allocation6 + $0x298] sm:$0xff]
          %v613 = vld [vmem:[#allocation6 + $0x2a0] sm:$0xff]
          %v614 = vld [vmem:[#allocation6 + $0x2a8] sm:$0xff]
          %v615 = vld [vmem:[#allocation6 + $0x2b0] sm:$0xff]
          %v616 = vld [vmem:[#allocation6 + $0x2b8] sm:$0xff]
          %v617 = vld [vmem:[#allocation6 + $0x2c0] sm:$0xff]
          %v618 = vld [vmem:[#allocation6 + $0x2c8] sm:$0xff]
          %v619 = vld [vmem:[#allocation6 + $0x2d0] sm:$0xff]
          %v620 = vld [vmem:[#allocation6 + $0x2d8] sm:$0xff]
          %v621 = vld [vmem:[#allocation6 + $0x2e0] sm:$0xff]
          %v622 = vld [vmem:[#allocation6 + $0x2e8] sm:$0xff]
          %v623 = vld [vmem:[#allocation6 + $0x2f0] sm:$0xff]
          %v624 = vld [vmem:[#allocation6 + $0x2f8] sm:$0xff]
          %v625 = vld [vmem:[#allocation6 + $0x300] sm:$0xff]
          %v626 = vld [vmem:[#allocation6 + $0x308] sm:$0xff]
          %v627 = vld [vmem:[#allocation6 + $0x310] sm:$0xff]
          %v628 = vld [vmem:[#allocation6 + $0x318] sm:$0xff]
          %v629 = vld [vmem:[#allocation6 + $0x320] sm:$0xff]
          %v630 = vld [vmem:[#allocation6 + $0x328] sm:$0xff]
          %v631 = vld [vmem:[#allocation6 + $0x330] sm:$0xff]
          %v632 = vld [vmem:[#allocation6 + $0x338] sm:$0xff]
          %v633 = vld [vmem:[#allocation6 + $0x340] sm:$0xff]
          %v634 = vld [vmem:[#allocation6 + $0x348] sm:$0xff]
          %v635 = vld [vmem:[#allocation6 + $0x350] sm:$0xff]
          %v636 = vld [vmem:[#allocation6 + $0x358] sm:$0xff]
          %v637 = vld [vmem:[#allocation6 + $0x360] sm:$0xff]
          %v638 = vld [vmem:[#allocation6 + $0x368] sm:$0xff]
          %v639 = vld [vmem:[#allocation6 + $0x370] sm:$0xff]
          %v640 = vld [vmem:[#allocation6 + $0x378] sm:$0xff]
          %v641 = vld [vmem:[#allocation6 + $0x380] sm:$0xff]
          %v642 = vld [vmem:[#allocation6 + $0x388] sm:$0xff]
          %v643 = vld [vmem:[#allocation6 + $0x390] sm:$0xff]
          %v644 = vld [vmem:[#allocation6 + $0x398] sm:$0xff]
          %v645 = vld [vmem:[#allocation6 + $0x3a0] sm:$0xff]
          %v646 = vld [vmem:[#allocation6 + $0x3a8] sm:$0xff]
          %v647 = vld [vmem:[#allocation6 + $0x3b0] sm:$0xff]
          %v648 = vld [vmem:[#allocation6 + $0x3b8] sm:$0xff]
          %v649 = vld [vmem:[#allocation6 + $0x3c0] sm:$0xff]
          %v650 = vld [vmem:[#allocation6 + $0x3c8] sm:$0xff]
          %v651 = vld [vmem:[#allocation6 + $0x3d0] sm:$0xff]
          %v652 = vld [vmem:[#allocation6 + $0x3d8] sm:$0xff]
          %v653 = vld [vmem:[#allocation6 + $0x3e0] sm:$0xff]
          %v654 = vld [vmem:[#allocation6 + $0x3e8] sm:$0xff]
          %v655 = vld [vmem:[#allocation6 + $0x3f0] sm:$0xff]
          %v656 = vld [vmem:[#allocation6 + $0x3f8] sm:$0xff]
          %v657 = vld [vmem:[#allocation6 + $0x400] sm:$0xff]
          %v658 = vld [vmem:[#allocation6 + $0x408] sm:$0xff]
          %v659 = vld [vmem:[#allocation6 + $0x410] sm:$0xff]
          %v660 = vld [vmem:[#allocation6 + $0x418] sm:$0xff]
          %v661 = vld [vmem:[#allocation6 + $0x420] sm:$0xff]
          %v662 = vld [vmem:[#allocation6 + $0x428] sm:$0xff]
          %v663 = vld [vmem:[#allocation6 + $0x430] sm:$0xff]
          %v664 = vld [vmem:[#allocation6 + $0x438] sm:$0xff]
          %v665 = vld [vmem:[#allocation6 + $0x440] sm:$0xff]
          %v666 = vld [vmem:[#allocation6 + $0x448] sm:$0xff]
          %v667 = vld [vmem:[#allocation6 + $0x450] sm:$0xff]
          %v668 = vld [vmem:[#allocation6 + $0x458] sm:$0xff]
          %v669 = vld [vmem:[#allocation6 + $0x460] sm:$0xff]
          %v670 = vld [vmem:[#allocation6 + $0x468] sm:$0xff]
          %v671 = vld [vmem:[#allocation6 + $0x470] sm:$0xff]
          %v672 = vld [vmem:[#allocation6 + $0x478] sm:$0xff]
          %v673 = vld [vmem:[#allocation6 + $0x480] sm:$0xff]
          %v674 = vld [vmem:[#allocation6 + $0x488] sm:$0xff]
          %v675 = vld [vmem:[#allocation6 + $0x490] sm:$0xff]
          %v676 = vld [vmem:[#allocation6 + $0x498] sm:$0xff]
          %v677 = vld [vmem:[#allocation6 + $0x4a0] sm:$0xff]
          %v678 = vld [vmem:[#allocation6 + $0x4a8] sm:$0xff]
          %v679 = vld [vmem:[#allocation6 + $0x4b0] sm:$0xff]
          %v680 = vld [vmem:[#allocation6 + $0x4b8] sm:$0xff]
          %v681 = vld [vmem:[#allocation6 + $0x4c0] sm:$0xff]
          %v682 = vld [vmem:[#allocation6 + $0x4c8] sm:$0xff]
          %v683 = vld [vmem:[#allocation6 + $0x4d0] sm:$0xff]
          %v684 = vld [vmem:[#allocation6 + $0x4d8] sm:$0xff]
          %v685 = vld [vmem:[#allocation6 + $0x4e0] sm:$0xff]
          %v686 = vld [vmem:[#allocation6 + $0x4e8] sm:$0xff]
          %v687 = vld [vmem:[#allocation6 + $0x4f0] sm:$0xff]
          %v688 = vld [vmem:[#allocation6 + $0x4f8] sm:$0xff]
          %v689 = vld [vmem:[#allocation6 + $0x500] sm:$0xff]
          %v690 = vld [vmem:[#allocation6 + $0x508] sm:$0xff]
          %v691 = vld [vmem:[#allocation6 + $0x510] sm:$0xff]
          %v692 = vld [vmem:[#allocation6 + $0x518] sm:$0xff]
          %v693 = vld [vmem:[#allocation6 + $0x520] sm:$0xff]
          %v694 = vld [vmem:[#allocation6 + $0x528] sm:$0xff]
          %v695 = vld [vmem:[#allocation6 + $0x530] sm:$0xff]
          %v696 = vld [vmem:[#allocation6 + $0x538] sm:$0xff]
          %v697 = vld [vmem:[#allocation6 + $0x540] sm:$0xff]
          %v698 = vld [vmem:[#allocation6 + $0x548] sm:$0xff]
          %v699 = vld [vmem:[#allocation6 + $0x550] sm:$0xff]
          %v700 = vld [vmem:[#allocation6 + $0x558] sm:$0xff]
          %v701 = vld [vmem:[#allocation6 + $0x560] sm:$0xff]
          %v702 = vld [vmem:[#allocation6 + $0x568] sm:$0xff]
          %v703 = vld [vmem:[#allocation6 + $0x570] sm:$0xff]
          %v704 = vld [vmem:[#allocation6 + $0x578] sm:$0xff]
          %v705 = vld [vmem:[#allocation6 + $0x580] sm:$0xff]
          %v706 = vld [vmem:[#allocation6 + $0x588] sm:$0xff]
          %v707 = vld [vmem:[#allocation6 + $0x590] sm:$0xff]
          %v708 = vld [vmem:[#allocation6 + $0x598] sm:$0xff]
          %v709 = vld [vmem:[#allocation6 + $0x5a0] sm:$0xff]
          %v710 = vld [vmem:[#allocation6 + $0x5a8] sm:$0xff]
          %v711 = vld [vmem:[#allocation6 + $0x5b0] sm:$0xff]
          %v712 = vld [vmem:[#allocation6 + $0x5b8] sm:$0xff]
          %v713 = vld [vmem:[#allocation6 + $0x5c0] sm:$0xff]
          %v714 = vld [vmem:[#allocation6 + $0x5c8] sm:$0xff]
          %v715 = vld [vmem:[#allocation6 + $0x5d0] sm:$0xff]
          %v716 = vld [vmem:[#allocation6 + $0x5d8] sm:$0xff]
          %v717 = vld [vmem:[#allocation6 + $0x5e0] sm:$0xff]
          %v718 = vld [vmem:[#allocation6 + $0x5e8] sm:$0xff]
          %v719 = vld [vmem:[#allocation6 + $0x5f0] sm:$0xff]
          %v720 = vld [vmem:[#allocation6 + $0x5f8] sm:$0xff]
          %v721 = vld [vmem:[#allocation6 + $0x600] sm:$0xff]
          %v722 = vld [vmem:[#allocation6 + $0x608] sm:$0xff]
          %v723 = vld [vmem:[#allocation6 + $0x610] sm:$0xff]
          %v724 = vld [vmem:[#allocation6 + $0x618] sm:$0xff]
          %v725 = vld [vmem:[#allocation6 + $0x620] sm:$0xff]
          %v726 = vld [vmem:[#allocation6 + $0x628] sm:$0xff]
          %v727 = vld [vmem:[#allocation6 + $0x630] sm:$0xff]
          %v728 = vld [vmem:[#allocation6 + $0x638] sm:$0xff]
          %v729 = vld [vmem:[#allocation6 + $0x640] sm:$0xff]
          %v730 = vld [vmem:[#allocation6 + $0x648] sm:$0xff]
          %v731 = vld [vmem:[#allocation6 + $0x650] sm:$0xff]
          %v732 = vld [vmem:[#allocation6 + $0x658] sm:$0xff]
          %v733 = vld [vmem:[#allocation6 + $0x660] sm:$0xff]
          %v734 = vld [vmem:[#allocation6 + $0x668] sm:$0xff]
          %v735 = vld [vmem:[#allocation6 + $0x670] sm:$0xff]
          %v736 = vld [vmem:[#allocation6 + $0x678] sm:$0xff]
          %v737 = vld [vmem:[#allocation6 + $0x680] sm:$0xff]
          %v738 = vld [vmem:[#allocation6 + $0x688] sm:$0xff]
          %v739 = vld [vmem:[#allocation6 + $0x690] sm:$0xff]
          %v740 = vld [vmem:[#allocation6 + $0x698] sm:$0xff]
          %v741 = vld [vmem:[#allocation6 + $0x6a0] sm:$0xff]
          %v742 = vld [vmem:[#allocation6 + $0x6a8] sm:$0xff]
          %v743 = vld [vmem:[#allocation6 + $0x6b0] sm:$0xff]
          %v744 = vld [vmem:[#allocation6 + $0x6b8] sm:$0xff]
          %v745 = vld [vmem:[#allocation6 + $0x6c0] sm:$0xff]
          %v746 = vld [vmem:[#allocation6 + $0x6c8] sm:$0xff]
          %v747 = vld [vmem:[#allocation6 + $0x6d0] sm:$0xff]
          %v748 = vld [vmem:[#allocation6 + $0x6d8] sm:$0xff]
          %v749 = vld [vmem:[#allocation6 + $0x6e0] sm:$0xff]
          %v750 = vld [vmem:[#allocation6 + $0x6e8] sm:$0xff]
          %v751 = vld [vmem:[#allocation6 + $0x6f0] sm:$0xff]
          %v752 = vld [vmem:[#allocation6 + $0x6f8] sm:$0xff]
          %v753 = vld [vmem:[#allocation6 + $0x700] sm:$0xff]
          %v754 = vld [vmem:[#allocation6 + $0x708] sm:$0xff]
          %v755 = vld [vmem:[#allocation6 + $0x710] sm:$0xff]
          %v756 = vld [vmem:[#allocation6 + $0x718] sm:$0xff]
          %v757 = vld [vmem:[#allocation6 + $0x720] sm:$0xff]
          %v758 = vld [vmem:[#allocation6 + $0x728] sm:$0xff]
          %v759 = vld [vmem:[#allocation6 + $0x730] sm:$0xff]
          %v760 = vld [vmem:[#allocation6 + $0x738] sm:$0xff]
          %v761 = vld [vmem:[#allocation6 + $0x740] sm:$0xff]
          %v762 = vld [vmem:[#allocation6 + $0x748] sm:$0xff]
          %v763 = vld [vmem:[#allocation6 + $0x750] sm:$0xff]
          %v764 = vld [vmem:[#allocation6 + $0x758] sm:$0xff]
          %v765 = vld [vmem:[#allocation6 + $0x760] sm:$0xff]
          %v766 = vld [vmem:[#allocation6 + $0x768] sm:$0xff]
          %v767 = vld [vmem:[#allocation6 + $0x770] sm:$0xff]
          %v768 = vld [vmem:[#allocation6 + $0x778] sm:$0xff]
          %v769 = vld [vmem:[#allocation6 + $0x780] sm:$0xff]
          %v770 = vld [vmem:[#allocation6 + $0x788] sm:$0xff]
          %v771 = vld [vmem:[#allocation6 + $0x790] sm:$0xff]
          %v772 = vld [vmem:[#allocation6 + $0x798] sm:$0xff]
          %v773 = vld [vmem:[#allocation6 + $0x7a0] sm:$0xff]
          %v774 = vld [vmem:[#allocation6 + $0x7a8] sm:$0xff]
          %v775 = vld [vmem:[#allocation6 + $0x7b0] sm:$0xff]
          %v776 = vld [vmem:[#allocation6 + $0x7b8] sm:$0xff]
          %v777 = vld [vmem:[#allocation6 + $0x7c0] sm:$0xff]
          %v778 = vld [vmem:[#allocation6 + $0x7c8] sm:$0xff]
          %v779 = vld [vmem:[#allocation6 + $0x7d0] sm:$0xff]
          %v780 = vld [vmem:[#allocation6 + $0x7d8] sm:$0xff]
          %v781 = vld [vmem:[#allocation6 + $0x7e0] sm:$0xff]
          %v782 = vld [vmem:[#allocation6 + $0x7e8] sm:$0xff]
          %v783 = vld [vmem:[#allocation6 + $0x7f0] sm:$0xff]
          %v784 = vld [vmem:[#allocation6 + $0x7f8] sm:$0xff]
          %v785 = vld [vmem:[%s2] sm:$0x3]
          %v787 = vlaneseq
          %v788 = vshrl.u32 %v787, 7
          %v789 = vsub.s32 0, %v788
          %v790 = vrot.slane %v785, %v789
          %v791 = vlaneseq
          %v792 = vshrl.u32 %v791, 7
          %v793 = vsub.s32 1, %v792
          %v794 = vrot.slane %v785, %v793
          %v799 = vcombine.high %v527, %v527
          %v801 = vunpack.c.l.s4 1983009808
          %v802 = vunpack.c.0.s8 %v801
          %v803 = vlaneseq
          %v804 = vshrl.u32 %v803, 7
          %v805 = vsub.s32 %v802, %v804
          %v806 = vrot.slane %v527, %v805
          %v808 = vunpack.c.l.s4 1983009808
          %v809 = vunpack.c.0.s8 %v808
          %v810 = vlaneseq
          %v811 = vshrl.u32 %v810, 7
          %v812 = vsub.s32 %v809, %v811
          %v813 = vrot.slane %v799, %v812
          %v814 = vcombine.high %v806, %v806
          %v815 = vcombine.high %v813, %v813
          %v816 = vcombine.high %v528, %v528
          %v818 = vunpack.c.l.s4 1983009808
          %v819 = vunpack.c.0.s8 %v818
          %v820 = vlaneseq
          %v821 = vshrl.u32 %v820, 7
          %v822 = vsub.s32 %v819, %v821
          %v823 = vrot.slane %v528, %v822
          %v825 = vunpack.c.l.s4 1983009808
          %v826 = vunpack.c.0.s8 %v825
          %v827 = vlaneseq
          %v828 = vshrl.u32 %v827, 7
          %v829 = vsub.s32 %v826, %v828
          %v830 = vrot.slane %v816, %v829
          %v831 = vcombine.high %v823, %v823
          %v832 = vcombine.high %v830, %v830
          %841 = vmatprep.subr.mxu0 %v560
          %842 = vmatpush1.msra.mxu0 %v559
          %843 = vmatprep.subr.mxu0 %v558
          %844 = vmatpush1.msra.mxu0 %v557
          %845 = vmatprep.subr.mxu0 %v556
          %846 = vmatpush1.msra.mxu0 %v555
          %847 = vmatprep.subr.mxu0 %v554
          %848 = vmatpush1.msra.mxu0 %v553
          %849 = vmatprep.subr.mxu0 %v552
          %850 = vmatpush1.msra.mxu0 %v551
          %851 = vmatprep.subr.mxu0 %v550
          %852 = vmatpush1.msra.mxu0 %v549
          %853 = vmatprep.subr.mxu0 %v548
          %854 = vmatpush1.msra.mxu0 %v547
          %855 = vmatprep.subr.mxu0 %v546
          %856 = vmatpush1.msra.mxu0 %v545
          %857 = vmatprep.subr.mxu0 %v544
          %858 = vmatpush1.msra.mxu0 %v543
          %859 = vmatprep.subr.mxu0 %v542
          %860 = vmatpush1.msra.mxu0 %v541
          %861 = vmatprep.subr.mxu0 %v540
          %862 = vmatpush1.msra.mxu0 %v539
          %863 = vmatprep.subr.mxu0 %v538
          %864 = vmatpush1.msra.mxu0 %v537
          %865 = vmatprep.subr.mxu0 %v536
          %866 = vmatpush1.msra.mxu0 %v535
          %867 = vmatprep.subr.mxu0 %v534
          %868 = vmatpush1.msra.mxu0 %v533
          %869 = vmatprep.subr.mxu0 %v532
          %870 = vmatpush1.msra.mxu0 %v531
          %871 = vmatprep.subr.mxu0 %v530
          %872 = vmatpush1.msra.mxu0 %v529
          %873 = vmatprep.subr.mxu0 %v592
          %874 = vmatpush2.msra.mxu0 %v591
          %875 = vmatprep.subr.mxu0 %v590
          %876 = vmatpush2.msra.mxu0 %v589
          %877 = vmatprep.subr.mxu0 %v588
          %878 = vmatpush2.msra.mxu0 %v587
          %879 = vmatprep.subr.mxu0 %v586
          %880 = vmatpush2.msra.mxu0 %v585
          %881 = vmatprep.subr.mxu0 %v584
          %882 = vmatpush2.msra.mxu0 %v583
          %883 = vmatprep.subr.mxu0 %v582
          %884 = vmatpush2.msra.mxu0 %v581
          %885 = vmatprep.subr.mxu0 %v580
          %886 = vmatpush2.msra.mxu0 %v579
          %887 = vmatprep.subr.mxu0 %v578
          %888 = vmatpush2.msra.mxu0 %v577
          %889 = vmatprep.subr.mxu0 %v576
          %890 = vmatpush2.msra.mxu0 %v575
          %891 = vmatprep.subr.mxu0 %v574
          %892 = vmatpush2.msra.mxu0 %v573
          %893 = vmatprep.subr.mxu0 %v572
          %894 = vmatpush2.msra.mxu0 %v571
          %895 = vmatprep.subr.mxu0 %v570
          %896 = vmatpush2.msra.mxu0 %v569
          %897 = vmatprep.subr.mxu0 %v568
          %898 = vmatpush2.msra.mxu0 %v567
          %899 = vmatprep.subr.mxu0 %v566
          %900 = vmatpush2.msra.mxu0 %v565
          %901 = vmatprep.subr.mxu0 %v564
          %902 = vmatpush2.msra.mxu0 %v563
          %903 = vmatprep.subr.mxu0 %v562
          %904 = vmatpush2.msra.mxu0 %v561
          %905 = vmatprep.mubr.f32.mxu0 %v814
          %906 = vmatmul.mubr.f32.gmra.mxu0 %v806
          %v907 = vpop.f32.mrf.mxu0
          %v908 = vadd.f32 %v790, %v907
          %v909 = vpop.f32.mrf.mxu0
          %v910 = vadd.f32 %v794, %v909
          %911 = vdwg.mxu0
          %912 = vmatprep.subr.mxu0 %v624
          %913 = vmatpush1.msra.mxu0 %v623
          %914 = vmatprep.subr.mxu0 %v622
          %915 = vmatpush1.msra.mxu0 %v621
          %916 = vmatprep.subr.mxu0 %v620
          %917 = vmatpush1.msra.mxu0 %v619
          %918 = vmatprep.subr.mxu0 %v618
          %919 = vmatpush1.msra.mxu0 %v617
          %920 = vmatprep.subr.mxu0 %v616
          %921 = vmatpush1.msra.mxu0 %v615
          %922 = vmatprep.subr.mxu0 %v614
          %923 = vmatpush1.msra.mxu0 %v613
          %924 = vmatprep.subr.mxu0 %v612
          %925 = vmatpush1.msra.mxu0 %v611
          %926 = vmatprep.subr.mxu0 %v610
          %927 = vmatpush1.msra.mxu0 %v609
          %928 = vmatprep.subr.mxu0 %v608
          %929 = vmatpush1.msra.mxu0 %v607
          %930 = vmatprep.subr.mxu0 %v606
          %931 = vmatpush1.msra.mxu0 %v605
          %932 = vmatprep.subr.mxu0 %v604
          %933 = vmatpush1.msra.mxu0 %v603
          %934 = vmatprep.subr.mxu0 %v602
          %935 = vmatpush1.msra.mxu0 %v601
          %936 = vmatprep.subr.mxu0 %v600
          %937 = vmatpush1.msra.mxu0 %v599
          %938 = vmatprep.subr.mxu0 %v598
          %939 = vmatpush1.msra.mxu0 %v597
          %940 = vmatprep.subr.mxu0 %v596
          %941 = vmatpush1.msra.mxu0 %v595
          %942 = vmatprep.subr.mxu0 %v594
          %943 = vmatpush1.msra.mxu0 %v593
          %944 = vmatprep.subr.mxu0 %v656
          %945 = vmatpush2.msra.mxu0 %v655
          %946 = vmatprep.subr.mxu0 %v654
          %947 = vmatpush2.msra.mxu0 %v653
          %948 = vmatprep.subr.mxu0 %v652
          %949 = vmatpush2.msra.mxu0 %v651
          %950 = vmatprep.subr.mxu0 %v650
          %951 = vmatpush2.msra.mxu0 %v649
          %952 = vmatprep.subr.mxu0 %v648
          %953 = vmatpush2.msra.mxu0 %v647
          %954 = vmatprep.subr.mxu0 %v646
          %955 = vmatpush2.msra.mxu0 %v645
          %956 = vmatprep.subr.mxu0 %v644
          %957 = vmatpush2.msra.mxu0 %v643
          %958 = vmatprep.subr.mxu0 %v642
          %959 = vmatpush2.msra.mxu0 %v641
          %960 = vmatprep.subr.mxu0 %v640
          %961 = vmatpush2.msra.mxu0 %v639
          %962 = vmatprep.subr.mxu0 %v638
          %963 = vmatpush2.msra.mxu0 %v637
          %964 = vmatprep.subr.mxu0 %v636
          %965 = vmatpush2.msra.mxu0 %v635
          %966 = vmatprep.subr.mxu0 %v634
          %967 = vmatpush2.msra.mxu0 %v633
          %968 = vmatprep.subr.mxu0 %v632
          %969 = vmatpush2.msra.mxu0 %v631
          %970 = vmatprep.subr.mxu0 %v630
          %971 = vmatpush2.msra.mxu0 %v629
          %972 = vmatprep.subr.mxu0 %v628
          %973 = vmatpush2.msra.mxu0 %v627
          %974 = vmatprep.subr.mxu0 %v626
          %975 = vmatpush2.msra.mxu0 %v625
          %976 = vmatprep.mubr.f32.mxu0 %v815
          %977 = vmatmul.mubr.f32.gmra.mxu0 %v813
          %v978 = vpop.f32.mrf.mxu0
          %v979 = vadd.f32 %v908, %v978
          %v980 = vpop.f32.mrf.mxu0
          %v981 = vadd.f32 %v910, %v980
          %982 = vdwg.mxu0
          %983 = vmatprep.subr.mxu0 %v688
          %984 = vmatpush1.msra.mxu0 %v687
          %985 = vmatprep.subr.mxu0 %v686
          %986 = vmatpush1.msra.mxu0 %v685
          %987 = vmatprep.subr.mxu0 %v684
          %988 = vmatpush1.msra.mxu0 %v683
          %989 = vmatprep.subr.mxu0 %v682
          %990 = vmatpush1.msra.mxu0 %v681
          %991 = vmatprep.subr.mxu0 %v680
          %992 = vmatpush1.msra.mxu0 %v679
          %993 = vmatprep.subr.mxu0 %v678
          %994 = vmatpush1.msra.mxu0 %v677
          %995 = vmatprep.subr.mxu0 %v676
          %996 = vmatpush1.msra.mxu0 %v675
          %997 = vmatprep.subr.mxu0 %v674
          %998 = vmatpush1.msra.mxu0 %v673
          %999 = vmatprep.subr.mxu0 %v672
          %1000 = vmatpush1.msra.mxu0 %v671
          %1001 = vmatprep.subr.mxu0 %v670
          %1002 = vmatpush1.msra.mxu0 %v669
          %1003 = vmatprep.subr.mxu0 %v668
          %1004 = vmatpush1.msra.mxu0 %v667
          %1005 = vmatprep.subr.mxu0 %v666
          %1006 = vmatpush1.msra.mxu0 %v665
          %1007 = vmatprep.subr.mxu0 %v664
          %1008 = vmatpush1.msra.mxu0 %v663
          %1009 = vmatprep.subr.mxu0 %v662
          %1010 = vmatpush1.msra.mxu0 %v661
          %1011 = vmatprep.subr.mxu0 %v660
          %1012 = vmatpush1.msra.mxu0 %v659
          %1013 = vmatprep.subr.mxu0 %v658
          %1014 = vmatpush1.msra.mxu0 %v657
          %1015 = vmatprep.subr.mxu0 %v720
          %1016 = vmatpush2.msra.mxu0 %v719
          %1017 = vmatprep.subr.mxu0 %v718
          %1018 = vmatpush2.msra.mxu0 %v717
          %1019 = vmatprep.subr.mxu0 %v716
          %1020 = vmatpush2.msra.mxu0 %v715
          %1021 = vmatprep.subr.mxu0 %v714
          %1022 = vmatpush2.msra.mxu0 %v713
          %1023 = vmatprep.subr.mxu0 %v712
          %1024 = vmatpush2.msra.mxu0 %v711
          %1025 = vmatprep.subr.mxu0 %v710
          %1026 = vmatpush2.msra.mxu0 %v709
          %1027 = vmatprep.subr.mxu0 %v708
          %1028 = vmatpush2.msra.mxu0 %v707
          %1029 = vmatprep.subr.mxu0 %v706
          %1030 = vmatpush2.msra.mxu0 %v705
          %1031 = vmatprep.subr.mxu0 %v704
          %1032 = vmatpush2.msra.mxu0 %v703
          %1033 = vmatprep.subr.mxu0 %v702
          %1034 = vmatpush2.msra.mxu0 %v701
          %1035 = vmatprep.subr.mxu0 %v700
          %1036 = vmatpush2.msra.mxu0 %v699
          %1037 = vmatprep.subr.mxu0 %v698
          %1038 = vmatpush2.msra.mxu0 %v697
          %1039 = vmatprep.subr.mxu0 %v696
          %1040 = vmatpush2.msra.mxu0 %v695
          %1041 = vmatprep.subr.mxu0 %v694
          %1042 = vmatpush2.msra.mxu0 %v693
          %1043 = vmatprep.subr.mxu0 %v692
          %1044 = vmatpush2.msra.mxu0 %v691
          %1045 = vmatprep.subr.mxu0 %v690
          %1046 = vmatpush2.msra.mxu0 %v689
          %1047 = vmatprep.mubr.f32.mxu0 %v831
          %1048 = vmatmul.mubr.f32.gmra.mxu0 %v823
          %v1049 = vpop.f32.mrf.mxu0
          %v1050 = vadd.f32 %v979, %v1049
          %v1051 = vpop.f32.mrf.mxu0
          %v1052 = vadd.f32 %v981, %v1051
          %1053 = vdwg.mxu0
          %1054 = vmatprep.subr.mxu0 %v752
          %1055 = vmatpush1.msra.mxu0 %v751
          %1056 = vmatprep.subr.mxu0 %v750
          %1057 = vmatpush1.msra.mxu0 %v749
          %1058 = vmatprep.subr.mxu0 %v748
          %1059 = vmatpush1.msra.mxu0 %v747
          %1060 = vmatprep.subr.mxu0 %v746
          %1061 = vmatpush1.msra.mxu0 %v745
          %1062 = vmatprep.subr.mxu0 %v744
          %1063 = vmatpush1.msra.mxu0 %v743
          %1064 = vmatprep.subr.mxu0 %v742
          %1065 = vmatpush1.msra.mxu0 %v741
          %1066 = vmatprep.subr.mxu0 %v740
          %1067 = vmatpush1.msra.mxu0 %v739
          %1068 = vmatprep.subr.mxu0 %v738
          %1069 = vmatpush1.msra.mxu0 %v737
          %1070 = vmatprep.subr.mxu0 %v736
          %1071 = vmatpush1.msra.mxu0 %v735
          %1072 = vmatprep.subr.mxu0 %v734
          %1073 = vmatpush1.msra.mxu0 %v733
          %1074 = vmatprep.subr.mxu0 %v732
          %1075 = vmatpush1.msra.mxu0 %v731
          %1076 = vmatprep.subr.mxu0 %v730
          %1077 = vmatpush1.msra.mxu0 %v729
          %1078 = vmatprep.subr.mxu0 %v728
          %1079 = vmatpush1.msra.mxu0 %v727
          %1080 = vmatprep.subr.mxu0 %v726
          %1081 = vmatpush1.msra.mxu0 %v725
          %1082 = vmatprep.subr.mxu0 %v724
          %1083 = vmatpush1.msra.mxu0 %v723
          %1084 = vmatprep.subr.mxu0 %v722
          %1085 = vmatpush1.msra.mxu0 %v721
          %1086 = vmatprep.subr.mxu0 %v784
          %1087 = vmatpush2.msra.mxu0 %v783
          %1088 = vmatprep.subr.mxu0 %v782
          %1089 = vmatpush2.msra.mxu0 %v781
          %1090 = vmatprep.subr.mxu0 %v780
          %1091 = vmatpush2.msra.mxu0 %v779
          %1092 = vmatprep.subr.mxu0 %v778
          %1093 = vmatpush2.msra.mxu0 %v777
          %1094 = vmatprep.subr.mxu0 %v776
          %1095 = vmatpush2.msra.mxu0 %v775
          %1096 = vmatprep.subr.mxu0 %v774
          %1097 = vmatpush2.msra.mxu0 %v773
          %1098 = vmatprep.subr.mxu0 %v772
          %1099 = vmatpush2.msra.mxu0 %v771
          %1100 = vmatprep.subr.mxu0 %v770
          %1101 = vmatpush2.msra.mxu0 %v769
          %1102 = vmatprep.subr.mxu0 %v768
          %1103 = vmatpush2.msra.mxu0 %v767
          %1104 = vmatprep.subr.mxu0 %v766
          %1105 = vmatpush2.msra.mxu0 %v765
          %1106 = vmatprep.subr.mxu0 %v764
          %1107 = vmatpush2.msra.mxu0 %v763
          %1108 = vmatprep.subr.mxu0 %v762
          %1109 = vmatpush2.msra.mxu0 %v761
          %1110 = vmatprep.subr.mxu0 %v760
          %1111 = vmatpush2.msra.mxu0 %v759
          %1112 = vmatprep.subr.mxu0 %v758
          %1113 = vmatpush2.msra.mxu0 %v757
          %1114 = vmatprep.subr.mxu0 %v756
          %1115 = vmatpush2.msra.mxu0 %v755
          %1116 = vmatprep.subr.mxu0 %v754
          %1117 = vmatpush2.msra.mxu0 %v753
          %1118 = vmatprep.mubr.f32.mxu0 %v832
          %1119 = vmatmul.mubr.f32.gmra.mxu0 %v830
          %v1120 = vpop.f32.mrf.mxu0
          %v1121 = vadd.f32 %v1050, %v1120
          %v1122 = vpop.f32.mrf.mxu0
          %v1123 = vadd.f32 %v1052, %v1122
          %1124 = vdwg.mxu0
          %v1125 = vmax.f32 %v1121, 0.0
          %v1126 = vmax.f32 %v1123, 0.0
          %v1127 = vld [vmem:[#allocation8] sm:$0xff]
          %v1128 = vld [vmem:[#allocation8 + $0x8] sm:$0xff]
          %v1129 = vld [vmem:[#allocation8 + $0x10] sm:$0xff]
          %v1130 = vld [vmem:[#allocation8 + $0x18] sm:$0xff]
          %v1131 = vld [vmem:[#allocation8 + $0x20] sm:$0xff]
          %v1132 = vld [vmem:[#allocation8 + $0x28] sm:$0xff]
          %v1133 = vld [vmem:[#allocation8 + $0x30] sm:$0xff]
          %v1134 = vld [vmem:[#allocation8 + $0x38] sm:$0xff]
          %v1135 = vld [vmem:[#allocation8 + $0x40] sm:$0xff]
          %v1136 = vld [vmem:[#allocation8 + $0x48] sm:$0xff]
          %v1137 = vld [vmem:[#allocation8 + $0x50] sm:$0xff]
          %v1138 = vld [vmem:[#allocation8 + $0x58] sm:$0xff]
          %v1139 = vld [vmem:[#allocation8 + $0x60] sm:$0xff]
          %v1140 = vld [vmem:[#allocation8 + $0x68] sm:$0xff]
          %v1141 = vld [vmem:[#allocation8 + $0x70] sm:$0xff]
          %v1142 = vld [vmem:[#allocation8 + $0x78] sm:$0xff]
          %v1143 = vld [vmem:[#allocation8 + $0x80] sm:$0xff]
          %v1144 = vld [vmem:[#allocation8 + $0x88] sm:$0xff]
          %v1145 = vld [vmem:[#allocation8 + $0x90] sm:$0xff]
          %v1146 = vld [vmem:[#allocation8 + $0x98] sm:$0xff]
          %v1147 = vld [vmem:[#allocation8 + $0xa0] sm:$0xff]
          %v1148 = vld [vmem:[#allocation8 + $0xa8] sm:$0xff]
          %v1149 = vld [vmem:[#allocation8 + $0xb0] sm:$0xff]
          %v1150 = vld [vmem:[#allocation8 + $0xb8] sm:$0xff]
          %v1151 = vld [vmem:[#allocation8 + $0xc0] sm:$0xff]
          %v1152 = vld [vmem:[#allocation8 + $0xc8] sm:$0xff]
          %v1153 = vld [vmem:[#allocation8 + $0xd0] sm:$0xff]
          %v1154 = vld [vmem:[#allocation8 + $0xd8] sm:$0xff]
          %v1155 = vld [vmem:[#allocation8 + $0xe0] sm:$0xff]
          %v1156 = vld [vmem:[#allocation8 + $0xe8] sm:$0xff]
          %v1157 = vld [vmem:[#allocation8 + $0xf0] sm:$0xff]
          %v1158 = vld [vmem:[#allocation8 + $0xf8] sm:$0xff]
          %v1159 = vld [vmem:[%s4] sm:$0x1]
          %v1161 = vlaneseq
          %v1162 = vshrl.u32 %v1161, 7
          %v1163 = vsub.s32 0, %v1162
          %v1164 = vrot.slane %v1159, %v1163
          %1166 = vmatprep.subr.mxu0 0.0
          %1167 = vmatpush1.msra.mxu0 %v1142
          %1168 = vmatprep.subr.mxu0 0.0
          %1169 = vmatpush1.msra.mxu0 %v1141
          %1170 = vmatprep.subr.mxu0 0.0
          %1171 = vmatpush1.msra.mxu0 %v1140
          %1172 = vmatprep.subr.mxu0 0.0
          %1173 = vmatpush1.msra.mxu0 %v1139
          %1174 = vmatprep.subr.mxu0 0.0
          %1175 = vmatpush1.msra.mxu0 %v1138
          %1176 = vmatprep.subr.mxu0 0.0
          %1177 = vmatpush1.msra.mxu0 %v1137
          %1178 = vmatprep.subr.mxu0 0.0
          %1179 = vmatpush1.msra.mxu0 %v1136
          %1180 = vmatprep.subr.mxu0 0.0
          %1181 = vmatpush1.msra.mxu0 %v1135
          %1182 = vmatprep.subr.mxu0 0.0
          %1183 = vmatpush1.msra.mxu0 %v1134
          %1184 = vmatprep.subr.mxu0 0.0
          %1185 = vmatpush1.msra.mxu0 %v1133
          %1186 = vmatprep.subr.mxu0 0.0
          %1187 = vmatpush1.msra.mxu0 %v1132
          %1188 = vmatprep.subr.mxu0 0.0
          %1189 = vmatpush1.msra.mxu0 %v1131
          %1190 = vmatprep.subr.mxu0 0.0
          %1191 = vmatpush1.msra.mxu0 %v1130
          %1192 = vmatprep.subr.mxu0 0.0
          %1193 = vmatpush1.msra.mxu0 %v1129
          %1194 = vmatprep.subr.mxu0 0.0
          %1195 = vmatpush1.msra.mxu0 %v1128
          %1196 = vmatprep.subr.mxu0 0.0
          %1197 = vmatpush1.msra.mxu0 %v1127
          %1198 = vmatprep.subr.mxu0 0.0
          %1199 = vmatpush2.msra.mxu0 %v1158
          %1200 = vmatprep.subr.mxu0 0.0
          %1201 = vmatpush2.msra.mxu0 %v1157
          %1202 = vmatprep.subr.mxu0 0.0
          %1203 = vmatpush2.msra.mxu0 %v1156
          %1204 = vmatprep.subr.mxu0 0.0
          %1205 = vmatpush2.msra.mxu0 %v1155
          %1206 = vmatprep.subr.mxu0 0.0
          %1207 = vmatpush2.msra.mxu0 %v1154
          %1208 = vmatprep.subr.mxu0 0.0
          %1209 = vmatpush2.msra.mxu0 %v1153
          %1210 = vmatprep.subr.mxu0 0.0
          %1211 = vmatpush2.msra.mxu0 %v1152
          %1212 = vmatprep.subr.mxu0 0.0
          %1213 = vmatpush2.msra.mxu0 %v1151
          %1214 = vmatprep.subr.mxu0 0.0
          %1215 = vmatpush2.msra.mxu0 %v1150
          %1216 = vmatprep.subr.mxu0 0.0
          %1217 = vmatpush2.msra.mxu0 %v1149
          %1218 = vmatprep.subr.mxu0 0.0
          %1219 = vmatpush2.msra.mxu0 %v1148
          %1220 = vmatprep.subr.mxu0 0.0
          %1221 = vmatpush2.msra.mxu0 %v1147
          %1222 = vmatprep.subr.mxu0 0.0
          %1223 = vmatpush2.msra.mxu0 %v1146
          %1224 = vmatprep.subr.mxu0 0.0
          %1225 = vmatpush2.msra.mxu0 %v1145
          %1226 = vmatprep.subr.mxu0 0.0
          %1227 = vmatpush2.msra.mxu0 %v1144
          %1228 = vmatprep.subr.mxu0 0.0
          %1229 = vmatpush2.msra.mxu0 %v1143
          %1230 = vmatprep.mubr.f32.mxu0 %v1126
          %1231 = vmatmul.mubr.f32.gmra.mxu0 %v1125
          %v1232 = vpop.f32.mrf.mxu0
          %v1233 = vadd.f32 %v1164, %v1232
          %v1234 = vpop.f32.mrf.mxu0
          %1235 = vdwg.mxu0
          %1236 = vst [vmem:[#allocation9] sm:$0x3] %v1233
        $region60: #{tpu_custom_call.1} parent=39 // pred_fallthru
          _
        // Predicated region
        $region61: #{tpu_custom_call.1} parent=39 // pred_check
          %p1237 = pneg %p163
        $region62: #{tpu_custom_call.1} parent=39 // pred_check_branch
          %1239 = sbr.rel (%p1237) target = $region64
        $region63: #{tpu_custom_call.1} parent=39 // pred_region
          %s1241 = ssub.s32 32, 32
          %1242 = vsyncadd [#allocation5], %s1241
          %s1243 = smul.addr %s25, 32
          %s1244 = scalar_lea.hbm %s5, %s1243
          %s1246 = sshll.u32 [#allocation9], 4
          %s1247 = int_to_ptr.vmem [resolvable:$true] %s1246
          %1249 = dma.vmem_to_hbm [thread:$0]  %s1247, 32, %s1244, [#allocation5]
        $region64: #{tpu_custom_call.1} parent=39 // pred_fallthru
          _
        // Predicated region
        $region65: #{tpu_custom_call.1} parent=39 // pred_check
          %p1250 = pneg %p163
        $region66: #{tpu_custom_call.1} parent=39 // pred_check_branch
          %1252 = sbr.rel (%p1250) target = $region68
        $region67: #{tpu_custom_call.1} parent=39 // pred_region
          %1253 = dma.done [#allocation5], 32
        $region68: #{tpu_custom_call.1} parent=39 // pred_fallthru
          _
      $region40: #{tpu_custom_call.1} parent=5 // pred_fallthru
        _
      %p1254 = scmp.le.s32.totalorder 2, %s16
      // Predicated region
      $region69: #{tpu_custom_call.1} parent=5 // pred_check
        %p1255 = pneg %p1254
      $region70: #{tpu_custom_call.1} parent=5 // pred_check_branch
        %1257 = sbr.rel (%p1255) target = $region72
      $region71: #{tpu_custom_call.1} parent=5 // pred_region
        %s1258 = ssub.s32 %s16, 2
      $region72: #{tpu_custom_call.1} parent=5 // pred_fallthru
        _
    $region6: #{tpu_custom_call.1} parent=1 // loop_footer
      %s20 = sadd.s32 1, %s16
    $region7: #{tpu_custom_call.1} parent=1 // loop_footer_branch
      %15 = sbr.rel target = $region3
    $region8: #{tpu_custom_call.1} parent=1 // loop_exit
      _
    %1259 = vsyncpa [#allocation4], 1
    %s1260 = scalar_lea.sflag [#allocation4], 1
    %1261 = vsyncpa %s1260, 1
    %1262 = vsyncpa [#allocation7], 1
    %1263 = vsyncpa [#allocation5], 1
    %s1264 = scalar_lea.sflag [#allocation5], 1
    %1265 = vsyncpa %s1264, 1

</llo_original>
